<compile_context>
chip_gen: v5e
topology: v5e:2x2
jax: 0.10.0
libtpu: 0.0.40
codegen_flags: <defaults>
</compile_context>

<pallas_src>
import jax
import jax.numpy as jnp
from jax.experimental import pallas as pl
from jax.experimental.pallas import tpu as pltpu

# ---------------- problem sizes (small, consistent with a conv model) ----------------
N = 2            # batch
C_IN = 4         # input channels
H = W = 16       # spatial
C_OUT = 8        # conv output channels
KSZ = 3          # conv kernel size (padding=1 -> SAME)
NUM_CLASSES = 10

NOISE_MEAN = 0.0   # AddGaussianNoise defaults used by StabilityTrainingModel
NOISE_STD = 0.04

K_RAW = KSZ * KSZ * C_IN     # 36   im2col contraction size
K_AUG = 48                   # 36 taps + 1 ones column (bias fold), padded to a 16-multiple
F_PAD = 128                  # lane-dense feature / class dim
M_ROWS = 2 * N * H * W       # 1024 pixels: clean batch then noisy batch, stacked on M
M_OUT = 2 * N                # 4    pooled rows: clean images then noisy images
PIX = H * W                  # 256  pixels per image
BIAS_CH = C_OUT              # conv-output channel that carries the constant-1 "bias lane"


def _stability_kernel(patch_ref, w1_ref, w2_ref, out_ref):
    """Grid-less kernel: conv-as-im2col + ReLU + avg-pool + linear for both passes.

    patch_ref : (M_ROWS, K_AUG)  bf16  im2col patches (+ ones column), clean+noisy on M
    w1_ref    : (K_AUG, F_PAD)   bf16  conv weights + b1 row + constant-1 channel column
    w2_ref    : (F_PAD, F_PAD)   f32   linear weights + b2 row (via the constant-1 channel)
    out_ref   : (M_OUT, F_PAD)   f32   logits for clean (rows 0..N-1) and noisy (N..2N-1)
    """
    # 3x3 SAME conv (+ folded bias) for every pixel of both passes: ONE MXU matmul.
    acc = jnp.dot(patch_ref[...], w1_ref[...],
                  preferred_element_type=jnp.float32)            # (M_ROWS, F_PAD) f32
    acc = jnp.maximum(acc, 0.0)                                  # ReLU; ones channel stays 1
    # Global average pool per image: f32 sublane reduction (no acc VMEM round-trip).
    pooled = jnp.mean(acc.reshape(M_OUT, PIX, F_PAD), axis=1)    # (M_OUT, F_PAD) f32
    # Final linear (+ folded b2) in f32; dense 128-lane store.
    out_ref[...] = jnp.dot(pooled, w2_ref[...],
                           preferred_element_type=jnp.float32)


def stability_forward(x_nchw, noise_nchw, w1, b1, w2, b2):
    """Returns (logits_clean, logits_noisy), each (N, NUM_CLASSES)."""
    # --- glue (XLA side): layout, perturbation, zero-pad, im2col, bias folding ---
    x = jnp.transpose(x_nchw, (0, 2, 3, 1)).astype(jnp.float32)        # NHWC
    noise = jnp.transpose(noise_nchw, (0, 2, 3, 1)).astype(jnp.float32)
    # AddGaussianNoise: x + N(0,1)*std + mean (mean applied explicitly).
    x_noisy = x + NOISE_STD * noise + NOISE_MEAN
    x_all = jnp.concatenate([x, x_noisy], axis=0)                      # (2N, H, W, C_IN)
    x_pad = jnp.pad(x_all, ((0, 0), (1, 1), (1, 1), (0, 0)))           # SAME-conv zero pad

    # im2col: (2N, H, W, 9*C_IN) -> (2N*H*W, 36); append ones column (folds b1, carries a
    # constant-1 channel used to fold b2); pad contraction dim only to 48 (compact in HBM).
    cols = [x_pad[:, kh:kh + H, kw:kw + W, :]
            for kh in range(KSZ) for kw in range(KSZ)]
    patches = jnp.concatenate(cols, axis=-1).reshape(M_ROWS, K_RAW)
    patches = jnp.concatenate([patches, jnp.ones((M_ROWS, 1), jnp.float32)], axis=-1)
    patches = jnp.pad(patches, ((0, 0), (0, K_AUG - (K_RAW + 1)))).astype(jnp.bfloat16)

    # Conv weights (KSZ, KSZ, C_IN, C_OUT) -> (36, 8) matrix; bias row at K_RAW;
    # column BIAS_CH becomes a constant-1 output channel (survives ReLU and pooling).
    w1_mat = w1.reshape(K_RAW, C_OUT).astype(jnp.float32)
    w1_aug = jnp.zeros((K_AUG, F_PAD), jnp.float32)
    w1_aug = w1_aug.at[:K_RAW, :C_OUT].set(w1_mat)
    w1_aug = w1_aug.at[K_RAW, :C_OUT].set(b1.astype(jnp.float32))
    w1_aug = w1_aug.at[K_RAW, BIAS_CH].set(1.0)
    w1_aug = w1_aug.astype(jnp.bfloat16)

    # Linear weights with b2 folded in via the constant-1 channel; kept in f32.
    w2_aug = jnp.zeros((F_PAD, F_PAD), jnp.float32)
    w2_aug = w2_aug.at[:C_OUT, :NUM_CLASSES].set(w2.astype(jnp.float32))
    w2_aug = w2_aug.at[BIAS_CH, :NUM_CLASSES].set(b2.astype(jnp.float32))

    cost = pl.CostEstimate(
        flops=2 * M_ROWS * K_AUG * F_PAD + 2 * M_OUT * F_PAD * F_PAD,
        transcendentals=0,
        bytes_accessed=(M_ROWS * K_AUG * 2        # patches (bf16)
                        + K_AUG * F_PAD * 2       # w1 (bf16)
                        + F_PAD * F_PAD * 4       # w2 (f32)
                        + M_OUT * F_PAD * 4),     # logits out (f32)
    )

    out = pl.pallas_call(
        _stability_kernel,
        out_shape=jax.ShapeDtypeStruct((M_OUT, F_PAD), jnp.float32),
        in_specs=[
            pl.BlockSpec(memory_space=pltpu.MemorySpace.VMEM),
            pl.BlockSpec(memory_space=pltpu.MemorySpace.VMEM),
            pl.BlockSpec(memory_space=pltpu.MemorySpace.VMEM),
        ],
        out_specs=pl.BlockSpec(memory_space=pltpu.MemorySpace.VMEM),
        cost_estimate=cost,
    )(patches, w1_aug, w2_aug)

    logits = out[:, :NUM_CLASSES]            # drop lane padding
    return logits[:N], logits[N:]            # (clean, noisy)


def _reference_inner_model(x_nchw, w1, b1, w2, b2):
    """Plain-JAX f32 reference of the inner model for correctness checking."""
    x = jnp.transpose(x_nchw, (0, 2, 3, 1))
    y = jax.lax.conv_general_dilated(
        x, w1, window_strides=(1, 1), padding="SAME",
        dimension_numbers=("NHWC", "HWIO", "NHWC"))
    y = jnp.maximum(y + b1, 0.0)
    pooled = jnp.mean(y, axis=(1, 2))
    return pooled @ w2 + b2


if __name__ == "__main__":
    key = jax.random.PRNGKey(0)
    k_w1, k_b1, k_w2, k_b2, k_x, k_n = jax.random.split(key, 6)

    # Deterministic synthetic parameters (shapes implied by the inner CNN above).
    w1 = 0.1 * jax.random.normal(k_w1, (KSZ, KSZ, C_IN, C_OUT), jnp.float32)
    b1 = 0.1 * jax.random.normal(k_b1, (C_OUT,), jnp.float32)
    w2 = 0.1 * jax.random.normal(k_w2, (C_OUT, NUM_CLASSES), jnp.float32)
    b2 = 0.1 * jax.random.normal(k_b2, (NUM_CLASSES,), jnp.float32)

    # Input (PyTorch NCHW convention) and the standard-normal noise draw.
    # TODO(synk): torch's .normal_() RNG stream cannot be reproduced bit-exactly; we sample
    # the equivalent N(0,1) noise with jax.random and apply mean/std scaling in the wrapper.
    x = jax.random.normal(k_x, (N, C_IN, H, W), jnp.float32)
    noise = jax.random.normal(k_n, (N, C_IN, H, W), jnp.float32)

    out_clean, out_noisy = stability_forward(x, noise, w1, b1, w2, b2)
    jax.block_until_ready((out_clean, out_noisy))

    # Correctness check against a plain-JAX f32 reference (kernel uses bf16 MXU operands
    # for the conv matmul only, with f32 accumulation/pooling/final matmul).
    ref_clean = _reference_inner_model(x, w1, b1, w2, b2)
    ref_noisy = _reference_inner_model(x + NOISE_STD * noise + NOISE_MEAN, w1, b1, w2, b2)
    assert out_clean.shape == (N, NUM_CLASSES) and out_noisy.shape == (N, NUM_CLASSES)
    assert jnp.allclose(out_clean, ref_clean, atol=2e-2, rtol=2e-2)
    assert jnp.allclose(out_noisy, ref_noisy, atol=2e-2, rtol=2e-2)

    print("KERNEL_OK")
</pallas_src>

<mosaic_0001>
module attributes {stable_mosaic.version = 11 : i64} {
  func.func @_stability_kernel(%arg0: memref<1024x48xbf16, #tpu.memory_space<vmem>>, %arg1: memref<48x128xbf16, #tpu.memory_space<vmem>>, %arg2: memref<128x128xf32, #tpu.memory_space<vmem>>, %arg3: memref<4x128xf32, #tpu.memory_space<vmem>>) attributes {dimension_semantics = [], scalar_prefetch = 0 : i64, scratch_operands = 0 : i64, tpu.core_type = #tpu.core_type<tc>} {
    %c0 = arith.constant 0 : index
    %c0_0 = arith.constant 0 : index
    %0 = vector.load %arg0[%c0, %c0_0] : memref<1024x48xbf16, #tpu.memory_space<vmem>>, vector<1024x48xbf16>
    %c0_1 = arith.constant 0 : index
    %c0_2 = arith.constant 0 : index
    %1 = vector.load %arg1[%c0_1, %c0_2] : memref<48x128xbf16, #tpu.memory_space<vmem>>, vector<48x128xbf16>
    %cst = arith.constant dense<0.000000e+00> : vector<1024x128xf32>
    %2 = tpu.matmul %0, %1, %cst {dimension_numbers = #tpu.dot_dimension_numbers<[1], [0], [0], [1], [0, 0, 1, 1], [], []>} : vector<1024x48xbf16>, vector<48x128xbf16>, vector<1024x128xf32> -> vector<1024x128xf32>
    %cst_3 = arith.constant 0.000000e+00 : f32
    %3 = vector.broadcast %cst_3 : f32 to vector<1024x128xf32>
    %4 = arith.maximumf %2, %3 : vector<1024x128xf32>
    %5 = vector.shape_cast %4 : vector<1024x128xf32> to vector<4x256x128xf32>
    %cst_4 = arith.constant dense<0.000000e+00> : vector<4x128xf32>
    %6 = vector.multi_reduction <add>, %5, %cst_4 [1] : vector<4x256x128xf32> to vector<4x128xf32>
    %cst_5 = arith.constant 2.560000e+02 : f32
    %7 = vector.broadcast %cst_5 : f32 to vector<4x128xf32>
    %8 = arith.divf %6, %7 : vector<4x128xf32>
    %c0_6 = arith.constant 0 : index
    %c0_7 = arith.constant 0 : index
    %9 = vector.load %arg2[%c0_6, %c0_7] : memref<128x128xf32, #tpu.memory_space<vmem>>, vector<128x128xf32>
    %cst_8 = arith.constant dense<0.000000e+00> : vector<4x128xf32>
    %10 = tpu.matmul %8, %9, %cst_8 {dimension_numbers = #tpu.dot_dimension_numbers<[1], [0], [0], [1], [0, 0, 1, 1], [], []>} : vector<4x128xf32>, vector<128x128xf32>, vector<4x128xf32> -> vector<4x128xf32>
    %c0_9 = arith.constant 0 : index
    %c0_10 = arith.constant 0 : index
    %11 = vector.load %arg3[%c0_9, %c0_10] : memref<4x128xf32, #tpu.memory_space<vmem>>, vector<4x128xf32>
    tpu.vector_store %arg3[%c0_9, %c0_10], %10 {strides = array<i32>} : memref<4x128xf32, #tpu.memory_space<vmem>>, vector<4x128xf32>,
    return
  }
}

</mosaic_0001>

<llo_original>
// kernel: tpu_custom_call.1
$region0: #{tpu_custom_call.1}
  #allocation0 [shape = 'u32[]', space=smem, size = 0x4, offset = 0x4, fixed_abs, tag = 'smem constant byte address 0x4 - core index']
  #allocation1 [shape = 'u32[72,128]{1,0:T(1,128)}', space=vmem, size = 0x9000, scoped, tag = 'internal scratch']
  %s0 = inlined_call_operand.vmem [shape: bf16[1024,48], index: 0, kind: input, shape index: {}]
  %s1 = inlined_call_operand.vmem [shape: bf16[48,128], index: 1, kind: input, shape index: {}]
  %s2 = inlined_call_operand.vmem [shape: f32[128,128], index: 2, kind: input, shape index: {}]
  %s3 = inlined_call_operand.hbm [shape: f32[4,128], index: 3, kind: output, shape index: {}]
  %s4 = sld [smem:[#allocation0]]
  $region22: #{tpu_custom_call.1} parent=0
    _
  %s6 = ssub.s32 1, %s4
  %s7 = scalar_select 0, %s6, %s4
  $region1: #{tpu_custom_call.1} parent=0
    #allocation2 [shape = 'u8[2048]{0}', space=vmem, size = 0x800, scoped, tag = 'output window, operand 0, single buffered']
    #allocation3 [shape = 's32[1]{0}', space=sflag, size = 0x4, scoped, tag = 'scoped memory for tpu_custom_call.1']
    %8 = vsyncpa [#allocation3], 0
    // Predicated region
    $region2: #{tpu_custom_call.1} parent=1 // pred_check
      _
    $region3: #{tpu_custom_call.1} parent=1 // pred_check_branch
      %10 = sbr.rel (0) target = $region5
    $region4: #{tpu_custom_call.1} parent=1 // pred_region
      _
    $region5: #{tpu_custom_call.1} parent=1 // pred_fallthru
      _
    // Predicated region
    $region6: #{tpu_custom_call.1} parent=1 // pred_check
      _
    $region7: #{tpu_custom_call.1} parent=1 // pred_check_branch
      %12 = sbr.rel (0) target = $region9
    $region8: #{tpu_custom_call.1} parent=1 // pred_region
      _
    $region9: #{tpu_custom_call.1} parent=1 // pred_fallthru
      _
    // Predicated region
    $region10: #{tpu_custom_call.1} parent=1 // pred_check
      _
    $region11: #{tpu_custom_call.1} parent=1 // pred_check_branch
      %14 = sbr.rel (0) target = $region13
    $region12: #{tpu_custom_call.1} parent=1 // pred_region
      _
    $region13: #{tpu_custom_call.1} parent=1 // pred_fallthru
      _
    %v16 = vld [vmem:[%s0] sm:$0xf]
    %v17 = vld [vmem:[%s0 + $0x4] sm:$0xf]
    %v18 = vld [vmem:[%s0 + $0x8] sm:$0xf]
    %v19 = vld [vmem:[%s0 + $0xc] sm:$0xf]
    %v20 = vld [vmem:[%s0 + $0x10] sm:$0xf]
    %v21 = vld [vmem:[%s0 + $0x14] sm:$0xf]
    %v22 = vld [vmem:[%s0 + $0x18] sm:$0xf]
    %v23 = vld [vmem:[%s0 + $0x1c] sm:$0xf]
    %v24 = vld [vmem:[%s0 + $0x20] sm:$0xf]
    %v25 = vld [vmem:[%s0 + $0x24] sm:$0xf]
    %v26 = vld [vmem:[%s0 + $0x28] sm:$0xf]
    %v27 = vld [vmem:[%s0 + $0x2c] sm:$0xf]
    %v28 = vld [vmem:[%s0 + $0x30] sm:$0xf]
    %v29 = vld [vmem:[%s0 + $0x34] sm:$0xf]
    %v30 = vld [vmem:[%s0 + $0x38] sm:$0xf]
    %v31 = vld [vmem:[%s0 + $0x3c] sm:$0xf]
    %v32 = vld [vmem:[%s0 + $0x40] sm:$0xf]
    %v33 = vld [vmem:[%s0 + $0x44] sm:$0xf]
    %v34 = vld [vmem:[%s0 + $0x48] sm:$0xf]
    %v35 = vld [vmem:[%s0 + $0x4c] sm:$0xf]
    %v36 = vld [vmem:[%s0 + $0x50] sm:$0xf]
    %v37 = vld [vmem:[%s0 + $0x54] sm:$0xf]
    %v38 = vld [vmem:[%s0 + $0x58] sm:$0xf]
    %v39 = vld [vmem:[%s0 + $0x5c] sm:$0xf]
    %v40 = vld [vmem:[%s0 + $0x60] sm:$0xf]
    %v41 = vld [vmem:[%s0 + $0x64] sm:$0xf]
    %v42 = vld [vmem:[%s0 + $0x68] sm:$0xf]
    %v43 = vld [vmem:[%s0 + $0x6c] sm:$0xf]
    %v44 = vld [vmem:[%s0 + $0x70] sm:$0xf]
    %v45 = vld [vmem:[%s0 + $0x74] sm:$0xf]
    %v46 = vld [vmem:[%s0 + $0x78] sm:$0xf]
    %v47 = vld [vmem:[%s0 + $0x7c] sm:$0xf]
    %v48 = vld [vmem:[%s0 + $0x80] sm:$0xf]
    %v49 = vld [vmem:[%s0 + $0x84] sm:$0xf]
    %v50 = vld [vmem:[%s0 + $0x88] sm:$0xf]
    %v51 = vld [vmem:[%s0 + $0x8c] sm:$0xf]
    %v52 = vld [vmem:[%s0 + $0x90] sm:$0xf]
    %v53 = vld [vmem:[%s0 + $0x94] sm:$0xf]
    %v54 = vld [vmem:[%s0 + $0x98] sm:$0xf]
    %v55 = vld [vmem:[%s0 + $0x9c] sm:$0xf]
    %v56 = vld [vmem:[%s0 + $0xa0] sm:$0xf]
    %v57 = vld [vmem:[%s0 + $0xa4] sm:$0xf]
    %v58 = vld [vmem:[%s0 + $0xa8] sm:$0xf]
    %v59 = vld [vmem:[%s0 + $0xac] sm:$0xf]
    %v60 = vld [vmem:[%s0 + $0xb0] sm:$0xf]
    %v61 = vld [vmem:[%s0 + $0xb4] sm:$0xf]
    %v62 = vld [vmem:[%s0 + $0xb8] sm:$0xf]
    %v63 = vld [vmem:[%s0 + $0xbc] sm:$0xf]
    %v64 = vld [vmem:[%s0 + $0xc0] sm:$0xf]
    %v65 = vld [vmem:[%s0 + $0xc4] sm:$0xf]
    %v66 = vld [vmem:[%s0 + $0xc8] sm:$0xf]
    %v67 = vld [vmem:[%s0 + $0xcc] sm:$0xf]
    %v68 = vld [vmem:[%s0 + $0xd0] sm:$0xf]
    %v69 = vld [vmem:[%s0 + $0xd4] sm:$0xf]
    %v70 = vld [vmem:[%s0 + $0xd8] sm:$0xf]
    %v71 = vld [vmem:[%s0 + $0xdc] sm:$0xf]
    %v72 = vld [vmem:[%s0 + $0xe0] sm:$0xf]
    %v73 = vld [vmem:[%s0 + $0xe4] sm:$0xf]
    %v74 = vld [vmem:[%s0 + $0xe8] sm:$0xf]
    %v75 = vld [vmem:[%s0 + $0xec] sm:$0xf]
    %v76 = vld [vmem:[%s0 + $0xf0] sm:$0xf]
    %v77 = vld [vmem:[%s0 + $0xf4] sm:$0xf]
    %v78 = vld [vmem:[%s0 + $0xf8] sm:$0xf]
    %v79 = vld [vmem:[%s0 + $0xfc] sm:$0xf]
    %v80 = vld [vmem:[%s0 + $0x100] sm:$0xf]
    %v81 = vld [vmem:[%s0 + $0x104] sm:$0xf]
    %v82 = vld [vmem:[%s0 + $0x108] sm:$0xf]
    %v83 = vld [vmem:[%s0 + $0x10c] sm:$0xf]
    %v84 = vld [vmem:[%s0 + $0x110] sm:$0xf]
    %v85 = vld [vmem:[%s0 + $0x114] sm:$0xf]
    %v86 = vld [vmem:[%s0 + $0x118] sm:$0xf]
    %v87 = vld [vmem:[%s0 + $0x11c] sm:$0xf]
    %v88 = vld [vmem:[%s0 + $0x120] sm:$0xf]
    %v89 = vld [vmem:[%s0 + $0x124] sm:$0xf]
    %v90 = vld [vmem:[%s0 + $0x128] sm:$0xf]
    %v91 = vld [vmem:[%s0 + $0x12c] sm:$0xf]
    %v92 = vld [vmem:[%s0 + $0x130] sm:$0xf]
    %v93 = vld [vmem:[%s0 + $0x134] sm:$0xf]
    %v94 = vld [vmem:[%s0 + $0x138] sm:$0xf]
    %v95 = vld [vmem:[%s0 + $0x13c] sm:$0xf]
    %v96 = vld [vmem:[%s0 + $0x140] sm:$0xf]
    %v97 = vld [vmem:[%s0 + $0x144] sm:$0xf]
    %v98 = vld [vmem:[%s0 + $0x148] sm:$0xf]
    %v99 = vld [vmem:[%s0 + $0x14c] sm:$0xf]
    %v100 = vld [vmem:[%s0 + $0x150] sm:$0xf]
    %v101 = vld [vmem:[%s0 + $0x154] sm:$0xf]
    %v102 = vld [vmem:[%s0 + $0x158] sm:$0xf]
    %v103 = vld [vmem:[%s0 + $0x15c] sm:$0xf]
    %v104 = vld [vmem:[%s0 + $0x160] sm:$0xf]
    %v105 = vld [vmem:[%s0 + $0x164] sm:$0xf]
    %v106 = vld [vmem:[%s0 + $0x168] sm:$0xf]
    %v107 = vld [vmem:[%s0 + $0x16c] sm:$0xf]
    %v108 = vld [vmem:[%s0 + $0x170] sm:$0xf]
    %v109 = vld [vmem:[%s0 + $0x174] sm:$0xf]
    %v110 = vld [vmem:[%s0 + $0x178] sm:$0xf]
    %v111 = vld [vmem:[%s0 + $0x17c] sm:$0xf]
    %v112 = vld [vmem:[%s0 + $0x180] sm:$0xf]
    %v113 = vld [vmem:[%s0 + $0x184] sm:$0xf]
    %v114 = vld [vmem:[%s0 + $0x188] sm:$0xf]
    %v115 = vld [vmem:[%s0 + $0x18c] sm:$0xf]
    %v116 = vld [vmem:[%s0 + $0x190] sm:$0xf]
    %v117 = vld [vmem:[%s0 + $0x194] sm:$0xf]
    %v118 = vld [vmem:[%s0 + $0x198] sm:$0xf]
    %v119 = vld [vmem:[%s0 + $0x19c] sm:$0xf]
    %v120 = vld [vmem:[%s0 + $0x1a0] sm:$0xf]
    %v121 = vld [vmem:[%s0 + $0x1a4] sm:$0xf]
    %v122 = vld [vmem:[%s0 + $0x1a8] sm:$0xf]
    %v123 = vld [vmem:[%s0 + $0x1ac] sm:$0xf]
    %v124 = vld [vmem:[%s0 + $0x1b0] sm:$0xf]
    %v125 = vld [vmem:[%s0 + $0x1b4] sm:$0xf]
    %v126 = vld [vmem:[%s0 + $0x1b8] sm:$0xf]
    %v127 = vld [vmem:[%s0 + $0x1bc] sm:$0xf]
    %v128 = vld [vmem:[%s0 + $0x1c0] sm:$0xf]
    %v129 = vld [vmem:[%s0 + $0x1c4] sm:$0xf]
    %v130 = vld [vmem:[%s0 + $0x1c8] sm:$0xf]
    %v131 = vld [vmem:[%s0 + $0x1cc] sm:$0xf]
    %v132 = vld [vmem:[%s0 + $0x1d0] sm:$0xf]
    %v133 = vld [vmem:[%s0 + $0x1d4] sm:$0xf]
    %v134 = vld [vmem:[%s0 + $0x1d8] sm:$0xf]
    %v135 = vld [vmem:[%s0 + $0x1dc] sm:$0xf]
    %v136 = vld [vmem:[%s0 + $0x1e0] sm:$0xf]
    %v137 = vld [vmem:[%s0 + $0x1e4] sm:$0xf]
    %v138 = vld [vmem:[%s0 + $0x1e8] sm:$0xf]
    %v139 = vld [vmem:[%s0 + $0x1ec] sm:$0xf]
    %v140 = vld [vmem:[%s0 + $0x1f0] sm:$0xf]
    %v141 = vld [vmem:[%s0 + $0x1f4] sm:$0xf]
    %v142 = vld [vmem:[%s0 + $0x1f8] sm:$0xf]
    %v143 = vld [vmem:[%s0 + $0x1fc] sm:$0xf]
    %v144 = vld [vmem:[%s1] sm:$0xf]
    %v145 = vld [vmem:[%s1 + $0x4] sm:$0xf]
    %v146 = vld [vmem:[%s1 + $0x8] sm:$0xf]
    %v147 = vld [vmem:[%s1 + $0xc] sm:$0xf]
    %v148 = vld [vmem:[%s1 + $0x10] sm:$0xf]
    %v149 = vld [vmem:[%s1 + $0x14] sm:$0xf]
    %v278 = vunpack.c.l.b16 %v16
    %v279 = vunpack.c.l.b16 %v17
    %v280 = vunpack.c.l.b16 %v18
    %v281 = vunpack.c.l.b16 %v19
    %v282 = vunpack.c.l.b16 %v20
    %v283 = vunpack.c.l.b16 %v21
    %v284 = vunpack.c.l.b16 %v22
    %v285 = vunpack.c.l.b16 %v23
    %v286 = vunpack.c.l.b16 %v24
    %v287 = vunpack.c.l.b16 %v25
    %v288 = vunpack.c.l.b16 %v26
    %v289 = vunpack.c.l.b16 %v27
    %v290 = vunpack.c.l.b16 %v28
    %v291 = vunpack.c.l.b16 %v29
    %v292 = vunpack.c.l.b16 %v30
    %v293 = vunpack.c.l.b16 %v31
    %v294 = vunpack.c.l.b16 %v32
    %v295 = vunpack.c.l.b16 %v33
    %v296 = vunpack.c.l.b16 %v34
    %v297 = vunpack.c.l.b16 %v35
    %v298 = vunpack.c.l.b16 %v36
    %v299 = vunpack.c.l.b16 %v37
    %v300 = vunpack.c.l.b16 %v38
    %v301 = vunpack.c.l.b16 %v39
    %v302 = vunpack.c.l.b16 %v40
    %v303 = vunpack.c.l.b16 %v41
    %v304 = vunpack.c.l.b16 %v42
    %v305 = vunpack.c.l.b16 %v43
    %v306 = vunpack.c.l.b16 %v44
    %v307 = vunpack.c.l.b16 %v45
    %v308 = vunpack.c.l.b16 %v46
    %v309 = vunpack.c.l.b16 %v47
    %v310 = vunpack.c.l.b16 %v48
    %v311 = vunpack.c.l.b16 %v49
    %v312 = vunpack.c.l.b16 %v50
    %v313 = vunpack.c.l.b16 %v51
    %v314 = vunpack.c.l.b16 %v52
    %v315 = vunpack.c.l.b16 %v53
    %v316 = vunpack.c.l.b16 %v54
    %v317 = vunpack.c.l.b16 %v55
    %v318 = vunpack.c.l.b16 %v56
    %v319 = vunpack.c.l.b16 %v57
    %v320 = vunpack.c.l.b16 %v58
    %v321 = vunpack.c.l.b16 %v59
    %v322 = vunpack.c.l.b16 %v60
    %v323 = vunpack.c.l.b16 %v61
    %v324 = vunpack.c.l.b16 %v62
    %v325 = vunpack.c.l.b16 %v63
    %v326 = vunpack.c.l.b16 %v64
    %v327 = vunpack.c.l.b16 %v65
    %v328 = vunpack.c.l.b16 %v66
    %v329 = vunpack.c.l.b16 %v67
    %v330 = vunpack.c.l.b16 %v68
    %v331 = vunpack.c.l.b16 %v69
    %v332 = vunpack.c.l.b16 %v70
    %v333 = vunpack.c.l.b16 %v71
    %v334 = vunpack.c.l.b16 %v72
    %v335 = vunpack.c.l.b16 %v73
    %v336 = vunpack.c.l.b16 %v74
    %v337 = vunpack.c.l.b16 %v75
    %v338 = vunpack.c.l.b16 %v76
    %v339 = vunpack.c.l.b16 %v77
    %v340 = vunpack.c.l.b16 %v78
    %v341 = vunpack.c.l.b16 %v79
    %v342 = vunpack.c.l.b16 %v80
    %v343 = vunpack.c.l.b16 %v81
    %v344 = vunpack.c.l.b16 %v82
    %v345 = vunpack.c.l.b16 %v83
    %v346 = vunpack.c.l.b16 %v84
    %v347 = vunpack.c.l.b16 %v85
    %v348 = vunpack.c.l.b16 %v86
    %v349 = vunpack.c.l.b16 %v87
    %v350 = vunpack.c.l.b16 %v88
    %v351 = vunpack.c.l.b16 %v89
    %v352 = vunpack.c.l.b16 %v90
    %v353 = vunpack.c.l.b16 %v91
    %v354 = vunpack.c.l.b16 %v92
    %v355 = vunpack.c.l.b16 %v93
    %v356 = vunpack.c.l.b16 %v94
    %v357 = vunpack.c.l.b16 %v95
    %v358 = vunpack.c.l.b16 %v96
    %v359 = vunpack.c.l.b16 %v97
    %v360 = vunpack.c.l.b16 %v98
    %v361 = vunpack.c.l.b16 %v99
    %v362 = vunpack.c.l.b16 %v100
    %v363 = vunpack.c.l.b16 %v101
    %v364 = vunpack.c.l.b16 %v102
    %v365 = vunpack.c.l.b16 %v103
    %v366 = vunpack.c.l.b16 %v104
    %v367 = vunpack.c.l.b16 %v105
    %v368 = vunpack.c.l.b16 %v106
    %v369 = vunpack.c.l.b16 %v107
    %v370 = vunpack.c.l.b16 %v108
    %v371 = vunpack.c.l.b16 %v109
    %v372 = vunpack.c.l.b16 %v110
    %v373 = vunpack.c.l.b16 %v111
    %v374 = vunpack.c.l.b16 %v112
    %v375 = vunpack.c.l.b16 %v113
    %v376 = vunpack.c.l.b16 %v114
    %v377 = vunpack.c.l.b16 %v115
    %v378 = vunpack.c.l.b16 %v116
    %v379 = vunpack.c.l.b16 %v117
    %v380 = vunpack.c.l.b16 %v118
    %v381 = vunpack.c.l.b16 %v119
    %v382 = vunpack.c.l.b16 %v120
    %v383 = vunpack.c.l.b16 %v121
    %v384 = vunpack.c.l.b16 %v122
    %v385 = vunpack.c.l.b16 %v123
    %v386 = vunpack.c.l.b16 %v124
    %v387 = vunpack.c.l.b16 %v125
    %v388 = vunpack.c.l.b16 %v126
    %v389 = vunpack.c.l.b16 %v127
    %v390 = vunpack.c.l.b16 %v128
    %v391 = vunpack.c.l.b16 %v129
    %v392 = vunpack.c.l.b16 %v130
    %v393 = vunpack.c.l.b16 %v131
    %v394 = vunpack.c.l.b16 %v132
    %v395 = vunpack.c.l.b16 %v133
    %v396 = vunpack.c.l.b16 %v134
    %v397 = vunpack.c.l.b16 %v135
    %v398 = vunpack.c.l.b16 %v136
    %v399 = vunpack.c.l.b16 %v137
    %v400 = vunpack.c.l.b16 %v138
    %v401 = vunpack.c.l.b16 %v139
    %v402 = vunpack.c.l.b16 %v140
    %v403 = vunpack.c.l.b16 %v141
    %v404 = vunpack.c.l.b16 %v142
    %v405 = vunpack.c.l.b16 %v143
    %v406 = vpack.c.b16 %v279, %v278
    %v407 = vpack.c.b16 %v281, %v280
    %v408 = vpack.c.b16 %v283, %v282
    %v409 = vpack.c.b16 %v285, %v284
    %v410 = vpack.c.b16 %v287, %v286
    %v411 = vpack.c.b16 %v289, %v288
    %v412 = vpack.c.b16 %v291, %v290
    %v413 = vpack.c.b16 %v293, %v292
    %v414 = vpack.c.b16 %v295, %v294
    %v415 = vpack.c.b16 %v297, %v296
    %v416 = vpack.c.b16 %v299, %v298
    %v417 = vpack.c.b16 %v301, %v300
    %v418 = vpack.c.b16 %v303, %v302
    %v419 = vpack.c.b16 %v305, %v304
    %v420 = vpack.c.b16 %v307, %v306
    %v421 = vpack.c.b16 %v309, %v308
    %v422 = vpack.c.b16 %v311, %v310
    %v423 = vpack.c.b16 %v313, %v312
    %v424 = vpack.c.b16 %v315, %v314
    %v425 = vpack.c.b16 %v317, %v316
    %v426 = vpack.c.b16 %v319, %v318
    %v427 = vpack.c.b16 %v321, %v320
    %v428 = vpack.c.b16 %v323, %v322
    %v429 = vpack.c.b16 %v325, %v324
    %v430 = vpack.c.b16 %v327, %v326
    %v431 = vpack.c.b16 %v329, %v328
    %v432 = vpack.c.b16 %v331, %v330
    %v433 = vpack.c.b16 %v333, %v332
    %v434 = vpack.c.b16 %v335, %v334
    %v435 = vpack.c.b16 %v337, %v336
    %v436 = vpack.c.b16 %v339, %v338
    %v437 = vpack.c.b16 %v341, %v340
    %v438 = vpack.c.b16 %v343, %v342
    %v439 = vpack.c.b16 %v345, %v344
    %v440 = vpack.c.b16 %v347, %v346
    %v441 = vpack.c.b16 %v349, %v348
    %v442 = vpack.c.b16 %v351, %v350
    %v443 = vpack.c.b16 %v353, %v352
    %v444 = vpack.c.b16 %v355, %v354
    %v445 = vpack.c.b16 %v357, %v356
    %v446 = vpack.c.b16 %v359, %v358
    %v447 = vpack.c.b16 %v361, %v360
    %v448 = vpack.c.b16 %v363, %v362
    %v449 = vpack.c.b16 %v365, %v364
    %v450 = vpack.c.b16 %v367, %v366
    %v451 = vpack.c.b16 %v369, %v368
    %v452 = vpack.c.b16 %v371, %v370
    %v453 = vpack.c.b16 %v373, %v372
    %v454 = vpack.c.b16 %v375, %v374
    %v455 = vpack.c.b16 %v377, %v376
    %v456 = vpack.c.b16 %v379, %v378
    %v457 = vpack.c.b16 %v381, %v380
    %v458 = vpack.c.b16 %v383, %v382
    %v459 = vpack.c.b16 %v385, %v384
    %v460 = vpack.c.b16 %v387, %v386
    %v461 = vpack.c.b16 %v389, %v388
    %v462 = vpack.c.b16 %v391, %v390
    %v463 = vpack.c.b16 %v393, %v392
    %v464 = vpack.c.b16 %v395, %v394
    %v465 = vpack.c.b16 %v397, %v396
    %v466 = vpack.c.b16 %v399, %v398
    %v467 = vpack.c.b16 %v401, %v400
    %v468 = vpack.c.b16 %v403, %v402
    %v469 = vpack.c.b16 %v405, %v404
    %v476 = vunpack.c.l.b16 %v144
    %v477 = vunpack.c.l.b16 %v145
    %v478 = vunpack.c.l.b16 %v146
    %v479 = vunpack.c.l.b16 %v147
    %v480 = vunpack.c.l.b16 %v148
    %v481 = vunpack.c.l.b16 %v149
    %v482 = vpack.c.b16 %v477, %v476
    %v483 = vpack.c.b16 %v479, %v478
    %v484 = vpack.c.b16 %v481, %v480
    %vm488 = vcmask 392192
    %v490 = vsel %vm488, %v406, 0
    %v493 = vsel %vm488, %v407, 0
    %v496 = vsel %vm488, %v408, 0
    %v499 = vsel %vm488, %v409, 0
    %v502 = vsel %vm488, %v410, 0
    %v505 = vsel %vm488, %v411, 0
    %v508 = vsel %vm488, %v412, 0
    %v511 = vsel %vm488, %v413, 0
    %v514 = vsel %vm488, %v414, 0
    %v517 = vsel %vm488, %v415, 0
    %v520 = vsel %vm488, %v416, 0
    %v523 = vsel %vm488, %v417, 0
    %v526 = vsel %vm488, %v418, 0
    %v529 = vsel %vm488, %v419, 0
    %v532 = vsel %vm488, %v420, 0
    %v535 = vsel %vm488, %v421, 0
    %v538 = vsel %vm488, %v422, 0
    %v541 = vsel %vm488, %v423, 0
    %v544 = vsel %vm488, %v424, 0
    %v547 = vsel %vm488, %v425, 0
    %v550 = vsel %vm488, %v426, 0
    %v553 = vsel %vm488, %v427, 0
    %v556 = vsel %vm488, %v428, 0
    %v559 = vsel %vm488, %v429, 0
    %v562 = vsel %vm488, %v430, 0
    %v565 = vsel %vm488, %v431, 0
    %v568 = vsel %vm488, %v432, 0
    %v571 = vsel %vm488, %v433, 0
    %v574 = vsel %vm488, %v434, 0
    %v577 = vsel %vm488, %v435, 0
    %v580 = vsel %vm488, %v436, 0
    %v583 = vsel %vm488, %v437, 0
    %v586 = vsel %vm488, %v438, 0
    %v589 = vsel %vm488, %v439, 0
    %v592 = vsel %vm488, %v440, 0
    %v595 = vsel %vm488, %v441, 0
    %v598 = vsel %vm488, %v442, 0
    %v601 = vsel %vm488, %v443, 0
    %v604 = vsel %vm488, %v444, 0
    %v607 = vsel %vm488, %v445, 0
    %v610 = vsel %vm488, %v446, 0
    %v613 = vsel %vm488, %v447, 0
    %v616 = vsel %vm488, %v448, 0
    %v619 = vsel %vm488, %v449, 0
    %v622 = vsel %vm488, %v450, 0
    %v625 = vsel %vm488, %v451, 0
    %v628 = vsel %vm488, %v452, 0
    %v631 = vsel %vm488, %v453, 0
    %v634 = vsel %vm488, %v454, 0
    %v637 = vsel %vm488, %v455, 0
    %v640 = vsel %vm488, %v456, 0
    %v643 = vsel %vm488, %v457, 0
    %v646 = vsel %vm488, %v458, 0
    %v649 = vsel %vm488, %v459, 0
    %v652 = vsel %vm488, %v460, 0
    %v655 = vsel %vm488, %v461, 0
    %v658 = vsel %vm488, %v462, 0
    %v661 = vsel %vm488, %v463, 0
    %v664 = vsel %vm488, %v464, 0
    %v667 = vsel %vm488, %v465, 0
    %v670 = vsel %vm488, %v466, 0
    %v673 = vsel %vm488, %v467, 0
    %v676 = vsel %vm488, %v468, 0
    %v679 = vsel %vm488, %v469, 0
    %681 = vmatpush.bf16.msra.mxu0 0
    %682 = vmatpush.bf16.msra.mxu0 0
    %683 = vmatpush.bf16.msra.mxu0 0
    %684 = vmatpush.bf16.msra.mxu0 0
    %685 = vmatpush.bf16.msra.mxu0 0
    %686 = vmatpush.bf16.msra.mxu0 %v484
    %687 = vmatpush.bf16.msra.mxu0 %v483
    %688 = vmatpush.bf16.msra.mxu0 %v482
    %689 = vmatmul.bf16.gmra.mxu0 %v490
    %v690 = vpop.f32.mrf.mxu0
    %v691 = vadd.f32 0.0, %v690
    %v692 = vpop.f32.mrf.mxu0
    %v693 = vadd.f32 0.0, %v692
    %694 = vmatmul.bf16.gmra.mxu0 %v493
    %v695 = vpop.f32.mrf.mxu0
    %v696 = vadd.f32 0.0, %v695
    %v697 = vpop.f32.mrf.mxu0
    %v698 = vadd.f32 0.0, %v697
    %699 = vmatmul.bf16.gmra.mxu0 %v496
    %v700 = vpop.f32.mrf.mxu0
    %v701 = vadd.f32 0.0, %v700
    %v702 = vpop.f32.mrf.mxu0
    %v703 = vadd.f32 0.0, %v702
    %704 = vmatmul.bf16.gmra.mxu0 %v499
    %v705 = vpop.f32.mrf.mxu0
    %v706 = vadd.f32 0.0, %v705
    %v707 = vpop.f32.mrf.mxu0
    %v708 = vadd.f32 0.0, %v707
    %709 = vmatmul.bf16.gmra.mxu0 %v502
    %v710 = vpop.f32.mrf.mxu0
    %v711 = vadd.f32 0.0, %v710
    %v712 = vpop.f32.mrf.mxu0
    %v713 = vadd.f32 0.0, %v712
    %714 = vmatmul.bf16.gmra.mxu0 %v505
    %v715 = vpop.f32.mrf.mxu0
    %v716 = vadd.f32 0.0, %v715
    %v717 = vpop.f32.mrf.mxu0
    %v718 = vadd.f32 0.0, %v717
    %719 = vmatmul.bf16.gmra.mxu0 %v508
    %v720 = vpop.f32.mrf.mxu0
    %v721 = vadd.f32 0.0, %v720
    %v722 = vpop.f32.mrf.mxu0
    %v723 = vadd.f32 0.0, %v722
    %724 = vmatmul.bf16.gmra.mxu0 %v511
    %v725 = vpop.f32.mrf.mxu0
    %v726 = vadd.f32 0.0, %v725
    %v727 = vpop.f32.mrf.mxu0
    %v728 = vadd.f32 0.0, %v727
    %729 = vmatmul.bf16.gmra.mxu0 %v514
    %v730 = vpop.f32.mrf.mxu0
    %v731 = vadd.f32 0.0, %v730
    %v732 = vpop.f32.mrf.mxu0
    %v733 = vadd.f32 0.0, %v732
    %734 = vmatmul.bf16.gmra.mxu0 %v517
    %v735 = vpop.f32.mrf.mxu0
    %v736 = vadd.f32 0.0, %v735
    %v737 = vpop.f32.mrf.mxu0
    %v738 = vadd.f32 0.0, %v737
    %739 = vmatmul.bf16.gmra.mxu0 %v520
    %v740 = vpop.f32.mrf.mxu0
    %v741 = vadd.f32 0.0, %v740
    %v742 = vpop.f32.mrf.mxu0
    %v743 = vadd.f32 0.0, %v742
    %744 = vmatmul.bf16.gmra.mxu0 %v523
    %v745 = vpop.f32.mrf.mxu0
    %v746 = vadd.f32 0.0, %v745
    %v747 = vpop.f32.mrf.mxu0
    %v748 = vadd.f32 0.0, %v747
    %749 = vmatmul.bf16.gmra.mxu0 %v526
    %v750 = vpop.f32.mrf.mxu0
    %v751 = vadd.f32 0.0, %v750
    %v752 = vpop.f32.mrf.mxu0
    %v753 = vadd.f32 0.0, %v752
    %754 = vmatmul.bf16.gmra.mxu0 %v529
    %v755 = vpop.f32.mrf.mxu0
    %v756 = vadd.f32 0.0, %v755
    %v757 = vpop.f32.mrf.mxu0
    %v758 = vadd.f32 0.0, %v757
    %759 = vmatmul.bf16.gmra.mxu0 %v532
    %v760 = vpop.f32.mrf.mxu0
    %v761 = vadd.f32 0.0, %v760
    %v762 = vpop.f32.mrf.mxu0
    %v763 = vadd.f32 0.0, %v762
    %764 = vmatmul.bf16.gmra.mxu0 %v535
    %v765 = vpop.f32.mrf.mxu0
    %v766 = vadd.f32 0.0, %v765
    %v767 = vpop.f32.mrf.mxu0
    %v768 = vadd.f32 0.0, %v767
    %769 = vmatmul.bf16.gmra.mxu0 %v538
    %v770 = vpop.f32.mrf.mxu0
    %v771 = vadd.f32 0.0, %v770
    %v772 = vpop.f32.mrf.mxu0
    %v773 = vadd.f32 0.0, %v772
    %774 = vmatmul.bf16.gmra.mxu0 %v541
    %v775 = vpop.f32.mrf.mxu0
    %v776 = vadd.f32 0.0, %v775
    %v777 = vpop.f32.mrf.mxu0
    %v778 = vadd.f32 0.0, %v777
    %779 = vmatmul.bf16.gmra.mxu0 %v544
    %v780 = vpop.f32.mrf.mxu0
    %v781 = vadd.f32 0.0, %v780
    %v782 = vpop.f32.mrf.mxu0
    %v783 = vadd.f32 0.0, %v782
    %784 = vmatmul.bf16.gmra.mxu0 %v547
    %v785 = vpop.f32.mrf.mxu0
    %v786 = vadd.f32 0.0, %v785
    %v787 = vpop.f32.mrf.mxu0
    %v788 = vadd.f32 0.0, %v787
    %789 = vmatmul.bf16.gmra.mxu0 %v550
    %v790 = vpop.f32.mrf.mxu0
    %v791 = vadd.f32 0.0, %v790
    %v792 = vpop.f32.mrf.mxu0
    %v793 = vadd.f32 0.0, %v792
    %794 = vmatmul.bf16.gmra.mxu0 %v553
    %v795 = vpop.f32.mrf.mxu0
    %v796 = vadd.f32 0.0, %v795
    %v797 = vpop.f32.mrf.mxu0
    %v798 = vadd.f32 0.0, %v797
    %799 = vmatmul.bf16.gmra.mxu0 %v556
    %v800 = vpop.f32.mrf.mxu0
    %v801 = vadd.f32 0.0, %v800
    %v802 = vpop.f32.mrf.mxu0
    %v803 = vadd.f32 0.0, %v802
    %804 = vmatmul.bf16.gmra.mxu0 %v559
    %v805 = vpop.f32.mrf.mxu0
    %v806 = vadd.f32 0.0, %v805
    %v807 = vpop.f32.mrf.mxu0
    %v808 = vadd.f32 0.0, %v807
    %809 = vmatmul.bf16.gmra.mxu0 %v562
    %v810 = vpop.f32.mrf.mxu0
    %v811 = vadd.f32 0.0, %v810
    %v812 = vpop.f32.mrf.mxu0
    %v813 = vadd.f32 0.0, %v812
    %814 = vmatmul.bf16.gmra.mxu0 %v565
    %v815 = vpop.f32.mrf.mxu0
    %v816 = vadd.f32 0.0, %v815
    %v817 = vpop.f32.mrf.mxu0
    %v818 = vadd.f32 0.0, %v817
    %819 = vmatmul.bf16.gmra.mxu0 %v568
    %v820 = vpop.f32.mrf.mxu0
    %v821 = vadd.f32 0.0, %v820
    %v822 = vpop.f32.mrf.mxu0
    %v823 = vadd.f32 0.0, %v822
    %824 = vmatmul.bf16.gmra.mxu0 %v571
    %v825 = vpop.f32.mrf.mxu0
    %v826 = vadd.f32 0.0, %v825
    %v827 = vpop.f32.mrf.mxu0
    %v828 = vadd.f32 0.0, %v827
    %829 = vmatmul.bf16.gmra.mxu0 %v574
    %v830 = vpop.f32.mrf.mxu0
    %v831 = vadd.f32 0.0, %v830
    %v832 = vpop.f32.mrf.mxu0
    %v833 = vadd.f32 0.0, %v832
    %834 = vmatmul.bf16.gmra.mxu0 %v577
    %v835 = vpop.f32.mrf.mxu0
    %v836 = vadd.f32 0.0, %v835
    %v837 = vpop.f32.mrf.mxu0
    %v838 = vadd.f32 0.0, %v837
    %839 = vmatmul.bf16.gmra.mxu0 %v580
    %v840 = vpop.f32.mrf.mxu0
    %v841 = vadd.f32 0.0, %v840
    %v842 = vpop.f32.mrf.mxu0
    %v843 = vadd.f32 0.0, %v842
    %844 = vmatmul.bf16.gmra.mxu0 %v583
    %v845 = vpop.f32.mrf.mxu0
    %v846 = vadd.f32 0.0, %v845
    %v847 = vpop.f32.mrf.mxu0
    %v848 = vadd.f32 0.0, %v847
    %849 = vmatmul.bf16.gmra.mxu0 %v586
    %v850 = vpop.f32.mrf.mxu0
    %v851 = vadd.f32 0.0, %v850
    %v852 = vpop.f32.mrf.mxu0
    %v853 = vadd.f32 0.0, %v852
    %854 = vmatmul.bf16.gmra.mxu0 %v589
    %v855 = vpop.f32.mrf.mxu0
    %v856 = vadd.f32 0.0, %v855
    %v857 = vpop.f32.mrf.mxu0
    %v858 = vadd.f32 0.0, %v857
    %859 = vmatmul.bf16.gmra.mxu0 %v592
    %v860 = vpop.f32.mrf.mxu0
    %v861 = vadd.f32 0.0, %v860
    %v862 = vpop.f32.mrf.mxu0
    %v863 = vadd.f32 0.0, %v862
    %864 = vmatmul.bf16.gmra.mxu0 %v595
    %v865 = vpop.f32.mrf.mxu0
    %v866 = vadd.f32 0.0, %v865
    %v867 = vpop.f32.mrf.mxu0
    %v868 = vadd.f32 0.0, %v867
    %869 = vmatmul.bf16.gmra.mxu0 %v598
    %v870 = vpop.f32.mrf.mxu0
    %v871 = vadd.f32 0.0, %v870
    %v872 = vpop.f32.mrf.mxu0
    %v873 = vadd.f32 0.0, %v872
    %874 = vmatmul.bf16.gmra.mxu0 %v601
    %v875 = vpop.f32.mrf.mxu0
    %v876 = vadd.f32 0.0, %v875
    %v877 = vpop.f32.mrf.mxu0
    %v878 = vadd.f32 0.0, %v877
    %879 = vmatmul.bf16.gmra.mxu0 %v604
    %v880 = vpop.f32.mrf.mxu0
    %v881 = vadd.f32 0.0, %v880
    %v882 = vpop.f32.mrf.mxu0
    %v883 = vadd.f32 0.0, %v882
    %884 = vmatmul.bf16.gmra.mxu0 %v607
    %v885 = vpop.f32.mrf.mxu0
    %v886 = vadd.f32 0.0, %v885
    %v887 = vpop.f32.mrf.mxu0
    %v888 = vadd.f32 0.0, %v887
    %889 = vmatmul.bf16.gmra.mxu0 %v610
    %v890 = vpop.f32.mrf.mxu0
    %v891 = vadd.f32 0.0, %v890
    %v892 = vpop.f32.mrf.mxu0
    %v893 = vadd.f32 0.0, %v892
    %894 = vmatmul.bf16.gmra.mxu0 %v613
    %v895 = vpop.f32.mrf.mxu0
    %v896 = vadd.f32 0.0, %v895
    %v897 = vpop.f32.mrf.mxu0
    %v898 = vadd.f32 0.0, %v897
    %899 = vmatmul.bf16.gmra.mxu0 %v616
    %v900 = vpop.f32.mrf.mxu0
    %v901 = vadd.f32 0.0, %v900
    %v902 = vpop.f32.mrf.mxu0
    %v903 = vadd.f32 0.0, %v902
    %904 = vmatmul.bf16.gmra.mxu0 %v619
    %v905 = vpop.f32.mrf.mxu0
    %v906 = vadd.f32 0.0, %v905
    %v907 = vpop.f32.mrf.mxu0
    %v908 = vadd.f32 0.0, %v907
    %909 = vmatmul.bf16.gmra.mxu0 %v622
    %v910 = vpop.f32.mrf.mxu0
    %v911 = vadd.f32 0.0, %v910
    %v912 = vpop.f32.mrf.mxu0
    %v913 = vadd.f32 0.0, %v912
    %914 = vmatmul.bf16.gmra.mxu0 %v625
    %v915 = vpop.f32.mrf.mxu0
    %v916 = vadd.f32 0.0, %v915
    %v917 = vpop.f32.mrf.mxu0
    %v918 = vadd.f32 0.0, %v917
    %919 = vmatmul.bf16.gmra.mxu0 %v628
    %v920 = vpop.f32.mrf.mxu0
    %v921 = vadd.f32 0.0, %v920
    %v922 = vpop.f32.mrf.mxu0
    %v923 = vadd.f32 0.0, %v922
    %924 = vmatmul.bf16.gmra.mxu0 %v631
    %v925 = vpop.f32.mrf.mxu0
    %v926 = vadd.f32 0.0, %v925
    %v927 = vpop.f32.mrf.mxu0
    %v928 = vadd.f32 0.0, %v927
    %929 = vmatmul.bf16.gmra.mxu0 %v634
    %v930 = vpop.f32.mrf.mxu0
    %v931 = vadd.f32 0.0, %v930
    %v932 = vpop.f32.mrf.mxu0
    %v933 = vadd.f32 0.0, %v932
    %934 = vmatmul.bf16.gmra.mxu0 %v637
    %v935 = vpop.f32.mrf.mxu0
    %v936 = vadd.f32 0.0, %v935
    %v937 = vpop.f32.mrf.mxu0
    %v938 = vadd.f32 0.0, %v937
    %939 = vmatmul.bf16.gmra.mxu0 %v640
    %v940 = vpop.f32.mrf.mxu0
    %v941 = vadd.f32 0.0, %v940
    %v942 = vpop.f32.mrf.mxu0
    %v943 = vadd.f32 0.0, %v942
    %944 = vmatmul.bf16.gmra.mxu0 %v643
    %v945 = vpop.f32.mrf.mxu0
    %v946 = vadd.f32 0.0, %v945
    %v947 = vpop.f32.mrf.mxu0
    %v948 = vadd.f32 0.0, %v947
    %949 = vmatmul.bf16.gmra.mxu0 %v646
    %v950 = vpop.f32.mrf.mxu0
    %v951 = vadd.f32 0.0, %v950
    %v952 = vpop.f32.mrf.mxu0
    %v953 = vadd.f32 0.0, %v952
    %954 = vmatmul.bf16.gmra.mxu0 %v649
    %v955 = vpop.f32.mrf.mxu0
    %v956 = vadd.f32 0.0, %v955
    %v957 = vpop.f32.mrf.mxu0
    %v958 = vadd.f32 0.0, %v957
    %959 = vmatmul.bf16.gmra.mxu0 %v652
    %v960 = vpop.f32.mrf.mxu0
    %v961 = vadd.f32 0.0, %v960
    %v962 = vpop.f32.mrf.mxu0
    %v963 = vadd.f32 0.0, %v962
    %964 = vmatmul.bf16.gmra.mxu0 %v655
    %v965 = vpop.f32.mrf.mxu0
    %v966 = vadd.f32 0.0, %v965
    %v967 = vpop.f32.mrf.mxu0
    %v968 = vadd.f32 0.0, %v967
    %969 = vmatmul.bf16.gmra.mxu0 %v658
    %v970 = vpop.f32.mrf.mxu0
    %v971 = vadd.f32 0.0, %v970
    %v972 = vpop.f32.mrf.mxu0
    %v973 = vadd.f32 0.0, %v972
    %974 = vmatmul.bf16.gmra.mxu0 %v661
    %v975 = vpop.f32.mrf.mxu0
    %v976 = vadd.f32 0.0, %v975
    %v977 = vpop.f32.mrf.mxu0
    %v978 = vadd.f32 0.0, %v977
    %979 = vmatmul.bf16.gmra.mxu0 %v664
    %v980 = vpop.f32.mrf.mxu0
    %v981 = vadd.f32 0.0, %v980
    %v982 = vpop.f32.mrf.mxu0
    %v983 = vadd.f32 0.0, %v982
    %984 = vmatmul.bf16.gmra.mxu0 %v667
    %v985 = vpop.f32.mrf.mxu0
    %v986 = vadd.f32 0.0, %v985
    %v987 = vpop.f32.mrf.mxu0
    %v988 = vadd.f32 0.0, %v987
    %989 = vmatmul.bf16.gmra.mxu0 %v670
    %v990 = vpop.f32.mrf.mxu0
    %v991 = vadd.f32 0.0, %v990
    %v992 = vpop.f32.mrf.mxu0
    %v993 = vadd.f32 0.0, %v992
    %994 = vmatmul.bf16.gmra.mxu0 %v673
    %v995 = vpop.f32.mrf.mxu0
    %v996 = vadd.f32 0.0, %v995
    %v997 = vpop.f32.mrf.mxu0
    %v998 = vadd.f32 0.0, %v997
    %999 = vmatmul.bf16.gmra.mxu0 %v676
    %v1000 = vpop.f32.mrf.mxu0
    %v1001 = vadd.f32 0.0, %v1000
    %v1002 = vpop.f32.mrf.mxu0
    %v1003 = vadd.f32 0.0, %v1002
    %1004 = vmatmul.bf16.gmra.mxu0 %v679
    %v1005 = vpop.f32.mrf.mxu0
    %v1006 = vadd.f32 0.0, %v1005
    %v1007 = vpop.f32.mrf.mxu0
    %v1008 = vadd.f32 0.0, %v1007
    %1009 = vdwg.mxu0
    %v1010 = vmax.f32 %v691, 0.0
    %v1011 = vmax.f32 %v693, 0.0
    %v1012 = vmax.f32 %v696, 0.0
    %v1013 = vmax.f32 %v698, 0.0
    %v1014 = vmax.f32 %v701, 0.0
    %v1015 = vmax.f32 %v703, 0.0
    %v1016 = vmax.f32 %v706, 0.0
    %v1017 = vmax.f32 %v708, 0.0
    %v1018 = vmax.f32 %v711, 0.0
    %v1019 = vmax.f32 %v713, 0.0
    %v1020 = vmax.f32 %v716, 0.0
    %v1021 = vmax.f32 %v718, 0.0
    %v1022 = vmax.f32 %v721, 0.0
    %v1023 = vmax.f32 %v723, 0.0
    %v1024 = vmax.f32 %v726, 0.0
    %v1025 = vmax.f32 %v728, 0.0
    %v1026 = vmax.f32 %v731, 0.0
    %v1027 = vmax.f32 %v733, 0.0
    %v1028 = vmax.f32 %v736, 0.0
    %v1029 = vmax.f32 %v738, 0.0
    %v1030 = vmax.f32 %v741, 0.0
    %v1031 = vmax.f32 %v743, 0.0
    %v1032 = vmax.f32 %v746, 0.0
    %v1033 = vmax.f32 %v748, 0.0
    %v1034 = vmax.f32 %v751, 0.0
    %v1035 = vmax.f32 %v753, 0.0
    %v1036 = vmax.f32 %v756, 0.0
    %v1037 = vmax.f32 %v758, 0.0
    %v1038 = vmax.f32 %v761, 0.0
    %v1039 = vmax.f32 %v763, 0.0
    %v1040 = vmax.f32 %v766, 0.0
    %v1041 = vmax.f32 %v768, 0.0
    %v1042 = vmax.f32 %v771, 0.0
    %v1043 = vmax.f32 %v773, 0.0
    %v1044 = vmax.f32 %v776, 0.0
    %v1045 = vmax.f32 %v778, 0.0
    %v1046 = vmax.f32 %v781, 0.0
    %v1047 = vmax.f32 %v783, 0.0
    %v1048 = vmax.f32 %v786, 0.0
    %v1049 = vmax.f32 %v788, 0.0
    %v1050 = vmax.f32 %v791, 0.0
    %v1051 = vmax.f32 %v793, 0.0
    %v1052 = vmax.f32 %v796, 0.0
    %v1053 = vmax.f32 %v798, 0.0
    %v1054 = vmax.f32 %v801, 0.0
    %v1055 = vmax.f32 %v803, 0.0
    %v1056 = vmax.f32 %v806, 0.0
    %v1057 = vmax.f32 %v808, 0.0
    %v1058 = vmax.f32 %v811, 0.0
    %v1059 = vmax.f32 %v813, 0.0
    %v1060 = vmax.f32 %v816, 0.0
    %v1061 = vmax.f32 %v818, 0.0
    %v1062 = vmax.f32 %v821, 0.0
    %v1063 = vmax.f32 %v823, 0.0
    %v1064 = vmax.f32 %v826, 0.0
    %v1065 = vmax.f32 %v828, 0.0
    %v1066 = vmax.f32 %v831, 0.0
    %v1067 = vmax.f32 %v833, 0.0
    %v1068 = vmax.f32 %v836, 0.0
    %v1069 = vmax.f32 %v838, 0.0
    %v1070 = vmax.f32 %v841, 0.0
    %v1071 = vmax.f32 %v843, 0.0
    %v1072 = vmax.f32 %v846, 0.0
    %v1073 = vmax.f32 %v848, 0.0
    %v1074 = vmax.f32 %v851, 0.0
    %v1075 = vmax.f32 %v853, 0.0
    %v1076 = vmax.f32 %v856, 0.0
    %v1077 = vmax.f32 %v858, 0.0
    %v1078 = vmax.f32 %v861, 0.0
    %v1079 = vmax.f32 %v863, 0.0
    %v1080 = vmax.f32 %v866, 0.0
    %v1081 = vmax.f32 %v868, 0.0
    %v1082 = vmax.f32 %v871, 0.0
    %v1083 = vmax.f32 %v873, 0.0
    %v1084 = vmax.f32 %v876, 0.0
    %v1085 = vmax.f32 %v878, 0.0
    %v1086 = vmax.f32 %v881, 0.0
    %v1087 = vmax.f32 %v883, 0.0
    %v1088 = vmax.f32 %v886, 0.0
    %v1089 = vmax.f32 %v888, 0.0
    %v1090 = vmax.f32 %v891, 0.0
    %v1091 = vmax.f32 %v893, 0.0
    %v1092 = vmax.f32 %v896, 0.0
    %v1093 = vmax.f32 %v898, 0.0
    %v1094 = vmax.f32 %v901, 0.0
    %v1095 = vmax.f32 %v903, 0.0
    %v1096 = vmax.f32 %v906, 0.0
    %v1097 = vmax.f32 %v908, 0.0
    %v1098 = vmax.f32 %v911, 0.0
    %v1099 = vmax.f32 %v913, 0.0
    %v1100 = vmax.f32 %v916, 0.0
    %v1101 = vmax.f32 %v918, 0.0
    %v1102 = vmax.f32 %v921, 0.0
    %v1103 = vmax.f32 %v923, 0.0
    %v1104 = vmax.f32 %v926, 0.0
    %v1105 = vmax.f32 %v928, 0.0
    %v1106 = vmax.f32 %v931, 0.0
    %v1107 = vmax.f32 %v933, 0.0
    %v1108 = vmax.f32 %v936, 0.0
    %v1109 = vmax.f32 %v938, 0.0
    %v1110 = vmax.f32 %v941, 0.0
    %v1111 = vmax.f32 %v943, 0.0
    %v1112 = vmax.f32 %v946, 0.0
    %v1113 = vmax.f32 %v948, 0.0
    %v1114 = vmax.f32 %v951, 0.0
    %v1115 = vmax.f32 %v953, 0.0
    %v1116 = vmax.f32 %v956, 0.0
    %v1117 = vmax.f32 %v958, 0.0
    %v1118 = vmax.f32 %v961, 0.0
    %v1119 = vmax.f32 %v963, 0.0
    %v1120 = vmax.f32 %v966, 0.0
    %v1121 = vmax.f32 %v968, 0.0
    %v1122 = vmax.f32 %v971, 0.0
    %v1123 = vmax.f32 %v973, 0.0
    %v1124 = vmax.f32 %v976, 0.0
    %v1125 = vmax.f32 %v978, 0.0
    %v1126 = vmax.f32 %v981, 0.0
    %v1127 = vmax.f32 %v983, 0.0
    %v1128 = vmax.f32 %v986, 0.0
    %v1129 = vmax.f32 %v988, 0.0
    %v1130 = vmax.f32 %v991, 0.0
    %v1131 = vmax.f32 %v993, 0.0
    %v1132 = vmax.f32 %v996, 0.0
    %v1133 = vmax.f32 %v998, 0.0
    %v1134 = vmax.f32 %v1001, 0.0
    %v1135 = vmax.f32 %v1003, 0.0
    %v1136 = vmax.f32 %v1006, 0.0
    %v1137 = vmax.f32 %v1008, 0.0
    %v1138 = vadd.f32 %v1010, %v1011
    %v1139 = vadd.f32 %v1138, %v1012
    %v1140 = vadd.f32 %v1139, %v1013
    %v1141 = vadd.f32 %v1140, %v1014
    %v1142 = vadd.f32 %v1141, %v1015
    %v1143 = vadd.f32 %v1142, %v1016
    %v1144 = vadd.f32 %v1143, %v1017
    %v1145 = vadd.f32 %v1144, %v1018
    %v1146 = vadd.f32 %v1145, %v1019
    %v1147 = vadd.f32 %v1146, %v1020
    %v1148 = vadd.f32 %v1147, %v1021
    %v1149 = vadd.f32 %v1148, %v1022
    %v1150 = vadd.f32 %v1149, %v1023
    %v1151 = vadd.f32 %v1150, %v1024
    %v1152 = vadd.f32 %v1151, %v1025
    %v1153 = vadd.f32 %v1152, %v1026
    %v1154 = vadd.f32 %v1153, %v1027
    %v1155 = vadd.f32 %v1154, %v1028
    %v1156 = vadd.f32 %v1155, %v1029
    %v1157 = vadd.f32 %v1156, %v1030
    %v1158 = vadd.f32 %v1157, %v1031
    %v1159 = vadd.f32 %v1158, %v1032
    %v1160 = vadd.f32 %v1159, %v1033
    %v1161 = vadd.f32 %v1160, %v1034
    %v1162 = vadd.f32 %v1161, %v1035
    %v1163 = vadd.f32 %v1162, %v1036
    %v1164 = vadd.f32 %v1163, %v1037
    %v1165 = vadd.f32 %v1164, %v1038
    %v1166 = vadd.f32 %v1165, %v1039
    %v1167 = vadd.f32 %v1166, %v1040
    %v1168 = vadd.f32 %v1167, %v1041
    %v1169 = vrot.slane %v1168, 4
    %v1170 = vadd.f32 %v1168, %v1169
    %v1171 = vrot.slane %v1170, 2
    %v1172 = vadd.f32 %v1170, %v1171
    %v1173 = vrot.slane %v1172, 1
    %v1174 = vadd.f32 %v1172, %v1173
    %v1175 = vadd.f32 %v1042, %v1043
    %v1176 = vadd.f32 %v1175, %v1044
    %v1177 = vadd.f32 %v1176, %v1045
    %v1178 = vadd.f32 %v1177, %v1046
    %v1179 = vadd.f32 %v1178, %v1047
    %v1180 = vadd.f32 %v1179, %v1048
    %v1181 = vadd.f32 %v1180, %v1049
    %v1182 = vadd.f32 %v1181, %v1050
    %v1183 = vadd.f32 %v1182, %v1051
    %v1184 = vadd.f32 %v1183, %v1052
    %v1185 = vadd.f32 %v1184, %v1053
    %v1186 = vadd.f32 %v1185, %v1054
    %v1187 = vadd.f32 %v1186, %v1055
    %v1188 = vadd.f32 %v1187, %v1056
    %v1189 = vadd.f32 %v1188, %v1057
    %v1190 = vadd.f32 %v1189, %v1058
    %v1191 = vadd.f32 %v1190, %v1059
    %v1192 = vadd.f32 %v1191, %v1060
    %v1193 = vadd.f32 %v1192, %v1061
    %v1194 = vadd.f32 %v1193, %v1062
    %v1195 = vadd.f32 %v1194, %v1063
    %v1196 = vadd.f32 %v1195, %v1064
    %v1197 = vadd.f32 %v1196, %v1065
    %v1198 = vadd.f32 %v1197, %v1066
    %v1199 = vadd.f32 %v1198, %v1067
    %v1200 = vadd.f32 %v1199, %v1068
    %v1201 = vadd.f32 %v1200, %v1069
    %v1202 = vadd.f32 %v1201, %v1070
    %v1203 = vadd.f32 %v1202, %v1071
    %v1204 = vadd.f32 %v1203, %v1072
    %v1205 = vadd.f32 %v1204, %v1073
    %v1206 = vrot.slane %v1205, 4
    %v1207 = vadd.f32 %v1205, %v1206
    %v1208 = vrot.slane %v1207, 2
    %v1209 = vadd.f32 %v1207, %v1208
    %v1210 = vrot.slane %v1209, 1
    %v1211 = vadd.f32 %v1209, %v1210
    %v1212 = vadd.f32 %v1074, %v1075
    %v1213 = vadd.f32 %v1212, %v1076
    %v1214 = vadd.f32 %v1213, %v1077
    %v1215 = vadd.f32 %v1214, %v1078
    %v1216 = vadd.f32 %v1215, %v1079
    %v1217 = vadd.f32 %v1216, %v1080
    %v1218 = vadd.f32 %v1217, %v1081
    %v1219 = vadd.f32 %v1218, %v1082
    %v1220 = vadd.f32 %v1219, %v1083
    %v1221 = vadd.f32 %v1220, %v1084
    %v1222 = vadd.f32 %v1221, %v1085
    %v1223 = vadd.f32 %v1222, %v1086
    %v1224 = vadd.f32 %v1223, %v1087
    %v1225 = vadd.f32 %v1224, %v1088
    %v1226 = vadd.f32 %v1225, %v1089
    %v1227 = vadd.f32 %v1226, %v1090
    %v1228 = vadd.f32 %v1227, %v1091
    %v1229 = vadd.f32 %v1228, %v1092
    %v1230 = vadd.f32 %v1229, %v1093
    %v1231 = vadd.f32 %v1230, %v1094
    %v1232 = vadd.f32 %v1231, %v1095
    %v1233 = vadd.f32 %v1232, %v1096
    %v1234 = vadd.f32 %v1233, %v1097
    %v1235 = vadd.f32 %v1234, %v1098
    %v1236 = vadd.f32 %v1235, %v1099
    %v1237 = vadd.f32 %v1236, %v1100
    %v1238 = vadd.f32 %v1237, %v1101
    %v1239 = vadd.f32 %v1238, %v1102
    %v1240 = vadd.f32 %v1239, %v1103
    %v1241 = vadd.f32 %v1240, %v1104
    %v1242 = vadd.f32 %v1241, %v1105
    %v1243 = vrot.slane %v1242, 4
    %v1244 = vadd.f32 %v1242, %v1243
    %v1245 = vrot.slane %v1244, 2
    %v1246 = vadd.f32 %v1244, %v1245
    %v1247 = vrot.slane %v1246, 1
    %v1248 = vadd.f32 %v1246, %v1247
    %v1249 = vadd.f32 %v1106, %v1107
    %v1250 = vadd.f32 %v1249, %v1108
    %v1251 = vadd.f32 %v1250, %v1109
    %v1252 = vadd.f32 %v1251, %v1110
    %v1253 = vadd.f32 %v1252, %v1111
    %v1254 = vadd.f32 %v1253, %v1112
    %v1255 = vadd.f32 %v1254, %v1113
    %v1256 = vadd.f32 %v1255, %v1114
    %v1257 = vadd.f32 %v1256, %v1115
    %v1258 = vadd.f32 %v1257, %v1116
    %v1259 = vadd.f32 %v1258, %v1117
    %v1260 = vadd.f32 %v1259, %v1118
    %v1261 = vadd.f32 %v1260, %v1119
    %v1262 = vadd.f32 %v1261, %v1120
    %v1263 = vadd.f32 %v1262, %v1121
    %v1264 = vadd.f32 %v1263, %v1122
    %v1265 = vadd.f32 %v1264, %v1123
    %v1266 = vadd.f32 %v1265, %v1124
    %v1267 = vadd.f32 %v1266, %v1125
    %v1268 = vadd.f32 %v1267, %v1126
    %v1269 = vadd.f32 %v1268, %v1127
    %v1270 = vadd.f32 %v1269, %v1128
    %v1271 = vadd.f32 %v1270, %v1129
    %v1272 = vadd.f32 %v1271, %v1130
    %v1273 = vadd.f32 %v1272, %v1131
    %v1274 = vadd.f32 %v1273, %v1132
    %v1275 = vadd.f32 %v1274, %v1133
    %v1276 = vadd.f32 %v1275, %v1134
    %v1277 = vadd.f32 %v1276, %v1135
    %v1278 = vadd.f32 %v1277, %v1136
    %v1279 = vadd.f32 %v1278, %v1137
    %v1280 = vrot.slane %v1279, 4
    %v1281 = vadd.f32 %v1279, %v1280
    %v1282 = vrot.slane %v1281, 2
    %v1283 = vadd.f32 %v1281, %v1282
    %v1284 = vrot.slane %v1283, 1
    %v1285 = vadd.f32 %v1283, %v1284
    %v1286 = vrcp.pop 256.0
    %v1287 = vmul.f32 256.0, %v1286
    %v1288 = vsub.f32 1.0, %v1287
    %v1289 = vmul.f32 %v1286, %v1288
    %v1290 = vadd.f32 %v1286, %v1289
    %vm1291 = vweird.f32 %v1286
    %v1292 = vsel %vm1291, %v1286, %v1290
    %v1293 = vmul.f32 %v1174, %v1292
    %v1294 = vmul.f32 %v1211, %v1292
    %v1295 = vmul.f32 %v1248, %v1292
    %v1296 = vmul.f32 %v1285, %v1292
    %v1297 = vld [vmem:[%s2] sm:$0xff]
    %v1298 = vld [vmem:[%s2 + $0x8] sm:$0xff]
    %v1299 = vld [vmem:[%s2 + $0x10] sm:$0xff]
    %v1300 = vld [vmem:[%s2 + $0x18] sm:$0xff]
    %v1301 = vld [vmem:[%s2 + $0x20] sm:$0xff]
    %v1302 = vld [vmem:[%s2 + $0x28] sm:$0xff]
    %v1303 = vld [vmem:[%s2 + $0x30] sm:$0xff]
    %v1304 = vld [vmem:[%s2 + $0x38] sm:$0xff]
    %v1305 = vld [vmem:[%s2 + $0x40] sm:$0xff]
    %v1306 = vld [vmem:[%s2 + $0x48] sm:$0xff]
    %v1307 = vld [vmem:[%s2 + $0x50] sm:$0xff]
    %v1308 = vld [vmem:[%s2 + $0x58] sm:$0xff]
    %v1309 = vld [vmem:[%s2 + $0x60] sm:$0xff]
    %v1310 = vld [vmem:[%s2 + $0x68] sm:$0xff]
    %v1311 = vld [vmem:[%s2 + $0x70] sm:$0xff]
    %v1312 = vld [vmem:[%s2 + $0x78] sm:$0xff]
    %vm1317 = vcmask 1041409
    %v1318 = vsel %vm1317, %v1294, %v1293
    %vm1319 = vcmask 1042434
    %v1320 = vsel %vm1319, %v1295, %v1318
    %vm1321 = vcmask 1043459
    %v1322 = vsel %vm1321, %v1296, %v1320
    %1324 = vmatpush.msra.mxu0 %v1312
    %1325 = vmatpush.msra.mxu0 %v1311
    %1326 = vmatpush.msra.mxu0 %v1310
    %1327 = vmatpush.msra.mxu0 %v1309
    %1328 = vmatpush.msra.mxu0 %v1308
    %1329 = vmatpush.msra.mxu0 %v1307
    %1330 = vmatpush.msra.mxu0 %v1306
    %1331 = vmatpush.msra.mxu0 %v1305
    %1332 = vmatpush.msra.mxu0 %v1304
    %1333 = vmatpush.msra.mxu0 %v1303
    %1334 = vmatpush.msra.mxu0 %v1302
    %1335 = vmatpush.msra.mxu0 %v1301
    %1336 = vmatpush.msra.mxu0 %v1300
    %1337 = vmatpush.msra.mxu0 %v1299
    %1338 = vmatpush.msra.mxu0 %v1298
    %1339 = vmatpush.msra.mxu0 %v1297
    %1340 = vmatmul.f32.gmra.mxu0 %v1322
    %v1341 = vpop.f32.mrf.mxu0
    %v1342 = vadd.f32 0.0, %v1341
    %1343 = vdwg.mxu0
    %1344 = vst [vmem:[#allocation2] sm:$0xf] %v1342
    // Predicated region
    $region14: #{tpu_custom_call.1} parent=1 // pred_check
      _
    $region15: #{tpu_custom_call.1} parent=1 // pred_check_branch
      %1346 = sbr.rel (0) target = $region17
    $region16: #{tpu_custom_call.1} parent=1 // pred_region
      %1348 = vsyncadd [#allocation3], 0
      %s1350 = sshll.u32 [#allocation2], 4
      %s1351 = int_to_ptr.vmem [resolvable:$true] %s1350
      %s1352 = sshll.u32 %s3, 4
      %s1353 = int_to_ptr.hbm [resolvable:$true] %s1352
      %1355 = dma.vmem_to_hbm [thread:$0]  %s1351, 64, %s1353, [#allocation3]
    $region17: #{tpu_custom_call.1} parent=1 // pred_fallthru
      _
    // Predicated region
    $region18: #{tpu_custom_call.1} parent=1 // pred_check
      _
    $region19: #{tpu_custom_call.1} parent=1 // pred_check_branch
      %1357 = sbr.rel (0) target = $region21
    $region20: #{tpu_custom_call.1} parent=1 // pred_region
      %1359 = dma.done [#allocation3], 64
    $region21: #{tpu_custom_call.1} parent=1 // pred_fallthru
      _
    %1360 = vsyncpa [#allocation3], 1

</llo_original>
